<compile_context>
chip_gen: v6e
topology: v6e:2x2x1
jax: 0.10.0
libtpu: 0.0.40
codegen_flags: <defaults>
</compile_context>

<pallas_src>
import jax
import jax.numpy as jnp
from jax.experimental import pallas as pl
from jax.experimental.pallas import tpu as pltpu


_SQRT_2_OVER_PI = 0.7978845608028654  # sqrt(2/pi)


def _round_up(x, m):
    return ((x + m - 1) // m) * m


def _detected_vmem_bytes():
    """Per-core VMEM capacity; conservative 64 MiB (v7x per-TC) fallback."""
    try:
        return int(pltpu.get_tpu_info().vmem_capacity_bytes)
    except Exception:
        return 64 * 1024 * 1024


def _pick_hidden_chunk(H, target):
    """Largest lane-friendly divisor of H that is <= target (prefer x256)."""
    if H <= target:
        return H
    for cand in range(target, 255, -256):       # multiples of 256
        if H % cand == 0:
            return cand
    for cand in range(target, 127, -128):       # multiples of 128
        if H % cand == 0:
            return cand
    return H                                     # no nice divisor: single shot


def _make_mlp_kernel(num_chunks, chunk):
    def kernel(x_ref, w1_ref, b1_ref, w2_ref, b2_ref, o_ref):
        # x_ref : [TM, E]   w1_ref: [E, H]   b1_ref: [1, H]
        # w2_ref: [H, E]    b2_ref: [1, E]   o_ref : [TM, E]
        x = x_ref[...].astype(w1_ref.dtype)      # no-op when already weight dtype
        acc = None
        # Static unroll over the hidden dim: chunk offsets are compile-time
        # constants (lane-aligned), so the scheduler can overlap GELU of chunk
        # c with the MXU work of chunks c-1 / c+1.
        for c in range(num_chunks):
            lo = c * chunk
            h = jnp.dot(x, w1_ref[:, lo:lo + chunk],
                        preferred_element_type=jnp.float32)
            h = h + b1_ref[:, lo:lo + chunk].astype(jnp.float32)
            # GELU, tanh approximation (matches F.gelu(..., approximate='tanh')), f32.
            h = 0.5 * h * (1.0 + jnp.tanh(
                _SQRT_2_OVER_PI * (h + 0.044715 * h * h * h)))
            y = jnp.dot(h.astype(w2_ref.dtype), w2_ref[lo:lo + chunk, :],
                        preferred_element_type=jnp.float32)
            acc = y if acc is None else acc + y
        acc = acc + b2_ref[...].astype(jnp.float32)
        o_ref[...] = acc.astype(o_ref.dtype)
    return kernel


def mlp_forward(x, w1, b1, w2, b2, *, tm=None, hidden_chunk=512):
    """GPT-2 MLP: gelu_tanh(x @ w1 + b1) @ w2 + b2.

    x: [B, T, E]; w1: [E, 4E]; b1: [4E]; w2: [4E, E]; b2: [E].
    Output dtype matches x.  Store w1/w2 (and ideally x) in bf16 for best MXU
    throughput; matmul accumulation is always f32.
    """
    B, T, E = x.shape
    H = w1.shape[1]
    M = B * T

    # Activations move in the narrower of (x dtype, weight dtype): cast once
    # here instead of DMAing f32 rows and casting in-kernel.
    in_dtype = (w1.dtype
                if jnp.dtype(w1.dtype).itemsize < jnp.dtype(x.dtype).itemsize
                else x.dtype)
    out_dtype = x.dtype
    x2d = x.reshape(M, E).astype(in_dtype)

    # Sublane tile of the activation dtype: 8 (f32), 16 (bf16), 32 (int8/fp8).
    sub = max(8, 32 // jnp.dtype(in_dtype).itemsize)

    vmem_cap = _detected_vmem_bytes()
    if tm is None:
        # 128-MiB parts (v5e/v6e): big tiles amortize per-step overhead.
        # 64-MiB v7x: 512 keeps VMEM comfortable and gives >=2 grid steps so
        # the "parallel" axis feeds both TensorCores.
        tm = 1024 if vmem_cap >= (96 << 20) else 512
    tm = max(sub, min(_round_up(tm, sub), _round_up(M, sub)))

    # Avoid the jnp.pad / out[:M] HBM passes when a divisor tile of M exists
    # that isn't much smaller than the target tile.
    m_pad = M
    tile = None
    if M % sub == 0:
        cand = tm
        while cand >= max(sub, tm // 2):
            if M % cand == 0:
                tile = cand
                break
            cand -= sub
    if tile is None:
        tile = tm
        m_pad = _round_up(M, tile)
        x2d = jnp.pad(x2d, ((0, m_pad - M), (0, 0)))
    tm = tile
    grid = (m_pad // tm,)

    chunk = _pick_hidden_chunk(H, hidden_chunk)
    num_chunks = H // chunk
    kernel = _make_mlp_kernel(num_chunks, chunk)

    # Explicit VMEM budget (assume double-buffered weights as an upper bound so
    # the no-Buffered fallback also fits), clamped below physical capacity.
    w_item = jnp.dtype(w1.dtype).itemsize
    x_item = jnp.dtype(in_dtype).itemsize
    o_item = jnp.dtype(out_dtype).itemsize
    budget = (2 * (2 * E * H + H + E) * w_item          # weights + biases
              + 2 * tm * E * (x_item + o_item)          # double-buffered x/out tiles
              + tm * E * 8                              # f32 acc + cast temp
              + 2 * tm * chunk * 4)                     # f32 hidden chunk(s)
    vmem_limit = int(min(vmem_cap - (4 << 20),
                         max(int(budget * 1.25) + (8 << 20), 32 << 20)))

    b1r = b1.reshape(1, H)
    b2r = b2.reshape(1, E)

    def build(single_buffer_weights):
        if single_buffer_weights:
            def wspec(shape):
                # Grid-invariant (index_map == (0,0)) -> fetched once; a second
                # pipeline buffer would be pure VMEM waste.
                return pl.BlockSpec(shape, lambda i: (0, 0),
                                    pipeline_mode=pl.Buffered(1))
        else:
            def wspec(shape):
                return pl.BlockSpec(shape, lambda i: (0, 0))
        return pl.pallas_call(
            kernel,
            out_shape=jax.ShapeDtypeStruct((m_pad, E), out_dtype),
            grid=grid,
            in_specs=[
                pl.BlockSpec((tm, E), lambda i: (i, 0)),   # x row tile (pipelined)
                wspec((E, H)),                             # w1, VMEM-resident
                wspec((1, H)),                             # b1
                wspec((H, E)),                             # w2
                wspec((1, E)),                             # b2
            ],
            out_specs=pl.BlockSpec((tm, E), lambda i: (i, 0)),
            compiler_params=pltpu.CompilerParams(
                dimension_semantics=("parallel",),   # row tiles shard across v7x TCs
                vmem_limit_bytes=vmem_limit,
            ),
        )

    try:
        out = build(True)(x2d, w1, b1r, w2, b2r)
    except Exception:
        # pipeline_mode / pl.Buffered not supported on this jax build: fall back
        # to default double-buffering (identical results, more VMEM).
        out = build(False)(x2d, w1, b1r, w2, b2r)

    if m_pad != M:
        out = out[:M]
    return out.reshape(B, T, E)


def init_mlp_params(key, n_embed, dtype=jnp.float32):
    """Deterministic init mirroring nn.Linear default (uniform +/- 1/sqrt(fan_in))."""
    k1, k2, k3, k4 = jax.random.split(key, 4)
    hidden = 4 * n_embed
    bound1 = 1.0 / jnp.sqrt(jnp.float32(n_embed))
    bound2 = 1.0 / jnp.sqrt(jnp.float32(hidden))
    # stored as [in, out] (torch weight is [out, in]; y = x @ W^T + b)
    w1 = jax.random.uniform(k1, (n_embed, hidden), jnp.float32, -bound1, bound1).astype(dtype)
    b1 = jax.random.uniform(k2, (hidden,), jnp.float32, -bound1, bound1).astype(dtype)
    w2 = jax.random.uniform(k3, (hidden, n_embed), jnp.float32, -bound2, bound2).astype(dtype)
    b2 = jax.random.uniform(k4, (n_embed,), jnp.float32, -bound2, bound2).astype(dtype)
    return w1, b1, w2, b2


def mlp_reference(x, w1, b1, w2, b2):
    """Pure-JAX reference for correctness check (f32)."""
    h = jnp.dot(x, w1) + b1
    h = 0.5 * h * (1.0 + jnp.tanh(_SQRT_2_OVER_PI * (h + 0.044715 * h ** 3)))
    return jnp.dot(h, w2) + b2


if __name__ == "__main__":
    key = jax.random.PRNGKey(0)
    kx, kp = jax.random.split(key)

    # Small test shapes (real GPT-2: E=768, M up to 8192).
    B, T, n_embed = 2, 8, 64
    hidden = 4 * n_embed
    x = jax.random.normal(kx, (B, T, n_embed), jnp.float32)
    w1, b1, w2, b2 = init_mlp_params(kp, n_embed, dtype=jnp.float32)
    y_ref = mlp_reference(x, w1, b1, w2, b2)

    # f32 path: must match the pure-JAX reference tightly.
    y = jax.block_until_ready(mlp_forward(x, w1, b1, w2, b2))
    assert y.shape == (B, T, n_embed)
    assert jnp.allclose(y, y_ref, atol=1e-5, rtol=1e-5), "f32 mismatch vs reference"

    # Multi-chunk hidden-dim path (H=256 split into two 128-wide chunks).
    y_chunked = jax.block_until_ready(mlp_forward(x, w1, b1, w2, b2, hidden_chunk=128))
    assert jnp.allclose(y_chunked, y_ref, atol=1e-5, rtol=1e-5), "chunked-H mismatch"

    # Multi-step grid over M (tm=8 -> 2 row tiles, no padding needed).
    y_tiled = jax.block_until_ready(mlp_forward(x, w1, b1, w2, b2, tm=8))
    assert jnp.allclose(y_tiled, y_ref, atol=1e-5, rtol=1e-5), "tiled-M mismatch"

    # Ragged M (M=14 not a multiple of the sublane tile): exercises pad path.
    xr = jax.random.normal(kx, (B, 7, n_embed), jnp.float32)
    yr_ref = mlp_reference(xr, w1, b1, w2, b2)
    yr = jax.block_until_ready(mlp_forward(xr, w1, b1, w2, b2, tm=8))
    assert yr.shape == (B, 7, n_embed)
    assert jnp.allclose(yr, yr_ref, atol=1e-5, rtol=1e-5), "ragged-M mismatch"

    # bf16-weight production path: x is cast to bf16 in the wrapper, matmuls run
    # bf16 on the MXU with f32 accumulation; compare loosely against f32 ref.
    w1b, b1b, w2b, b2b = (w1.astype(jnp.bfloat16), b1.astype(jnp.bfloat16),
                          w2.astype(jnp.bfloat16), b2.astype(jnp.bfloat16))
    y_bf16 = jax.block_until_ready(mlp_forward(x, w1b, b1b, w2b, b2b))
    assert y_bf16.shape == (B, T, n_embed)
    assert jnp.allclose(y_bf16.astype(jnp.float32), y_ref, atol=2e-1, rtol=5e-2), \
        "bf16 path diverged from f32 reference"

    print("KERNEL_OK")
</pallas_src>

<mosaic_0001>
module attributes {stable_mosaic.version = 11 : i64} {
  func.func @kernel(%arg0: i32, %arg1: memref<16x64xf32, #tpu.memory_space<vmem>>, %arg2: memref<64x256xf32, #tpu.memory_space<vmem>>, %arg3: memref<1x256xf32, #tpu.memory_space<vmem>>, %arg4: memref<256x64xf32, #tpu.memory_space<vmem>>, %arg5: memref<1x64xf32, #tpu.memory_space<vmem>>, %arg6: memref<16x64xf32, #tpu.memory_space<vmem>>) attributes {dimension_semantics = [#tpu.dimension_semantics<parallel>], iteration_bounds = array<i64: 1>, scalar_prefetch = 0 : i64, scratch_operands = 0 : i64, tpu.core_type = #tpu.core_type<tc>, window_params = [{transform_indices = @transform_0, window_bounds = array<i64: 16, 64>}, {pipeline_mode = #tpu.pipeline_mode<synchronous>, transform_indices = @transform_1, window_bounds = array<i64: 64, 256>}, {pipeline_mode = #tpu.pipeline_mode<synchronous>, transform_indices = @transform_2, window_bounds = array<i64: 1, 256>}, {pipeline_mode = #tpu.pipeline_mode<synchronous>, transform_indices = @transform_3, window_bounds = array<i64: 256, 64>}, {pipeline_mode = #tpu.pipeline_mode<synchronous>, transform_indices = @transform_4, window_bounds = array<i64: 1, 64>}, {transform_indices = @transform_5, window_bounds = array<i64: 16, 64>}]} {
    %c0 = arith.constant 0 : index
    %c0_0 = arith.constant 0 : index
    %0 = vector.load %arg1[%c0, %c0_0] : memref<16x64xf32, #tpu.memory_space<vmem>>, vector<16x64xf32>
    %c0_1 = arith.constant 0 : index
    %c0_2 = arith.constant 0 : index
    %1 = vector.load %arg2[%c0_1, %c0_2] : memref<64x256xf32, #tpu.memory_space<vmem>>, vector<64x256xf32>
    %cst = arith.constant dense<0.000000e+00> : vector<16x256xf32>
    %2 = tpu.matmul %0, %1, %cst {dimension_numbers = #tpu.dot_dimension_numbers<[1], [0], [0], [1], [0, 0, 1, 1], [], []>} : vector<16x64xf32>, vector<64x256xf32>, vector<16x256xf32> -> vector<16x256xf32>
    %c0_3 = arith.constant 0 : index
    %c0_4 = arith.constant 0 : index
    %3 = vector.load %arg3[%c0_3, %c0_4] : memref<1x256xf32, #tpu.memory_space<vmem>>, vector<1x256xf32>
    %4 = vector.broadcast %3 : vector<1x256xf32> to vector<16x256xf32>
    %5 = arith.addf %2, %4 : vector<16x256xf32>
    %cst_5 = arith.constant 5.000000e-01 : f32
    %6 = vector.broadcast %cst_5 : f32 to vector<16x256xf32>
    %7 = arith.mulf %6, %5 : vector<16x256xf32>
    %cst_6 = arith.constant 4.471500e-02 : f32
    %8 = vector.broadcast %cst_6 : f32 to vector<16x256xf32>
    %9 = arith.mulf %8, %5 : vector<16x256xf32>
    %10 = arith.mulf %9, %5 : vector<16x256xf32>
    %11 = arith.mulf %10, %5 : vector<16x256xf32>
    %12 = arith.addf %5, %11 : vector<16x256xf32>
    %cst_7 = arith.constant 0.797884583 : f32
    %13 = vector.broadcast %cst_7 : f32 to vector<16x256xf32>
    %14 = arith.mulf %13, %12 : vector<16x256xf32>
    %15 = math.tanh %14 : vector<16x256xf32>
    %cst_8 = arith.constant 1.000000e+00 : f32
    %16 = vector.broadcast %cst_8 : f32 to vector<16x256xf32>
    %17 = arith.addf %16, %15 : vector<16x256xf32>
    %18 = arith.mulf %7, %17 : vector<16x256xf32>
    %c0_9 = arith.constant 0 : index
    %c0_10 = arith.constant 0 : index
    %19 = vector.load %arg4[%c0_9, %c0_10] : memref<256x64xf32, #tpu.memory_space<vmem>>, vector<256x64xf32>
    %cst_11 = arith.constant dense<0.000000e+00> : vector<16x64xf32>
    %20 = tpu.matmul %18, %19, %cst_11 {dimension_numbers = #tpu.dot_dimension_numbers<[1], [0], [0], [1], [0, 0, 1, 1], [], []>} : vector<16x256xf32>, vector<256x64xf32>, vector<16x64xf32> -> vector<16x64xf32>
    %c0_12 = arith.constant 0 : index
    %c0_13 = arith.constant 0 : index
    %21 = vector.load %arg5[%c0_12, %c0_13] : memref<1x64xf32, #tpu.memory_space<vmem>>, vector<1x64xf32>
    %22 = vector.broadcast %21 : vector<1x64xf32> to vector<16x64xf32>
    %23 = arith.addf %20, %22 : vector<16x64xf32>
    %c0_14 = arith.constant 0 : index
    %c0_15 = arith.constant 0 : index
    %24 = vector.load %arg6[%c0_14, %c0_15] : memref<16x64xf32, #tpu.memory_space<vmem>>, vector<16x64xf32>
    tpu.vector_store %arg6[%c0_14, %c0_15], %23 {strides = array<i32>} : memref<16x64xf32, #tpu.memory_space<vmem>>, vector<16x64xf32>,
    return
  }
  func.func @transform_0(%arg0: i32) -> (i32, i32) {
    %c0_i32 = arith.constant 0 : i32
    %c0_i32_0 = arith.constant 0 : i32
    return %arg0, %c0_i32 : i32, i32
  }
  func.func @transform_1(%arg0: i32) -> (i32, i32) {
    %c0_i32 = arith.constant 0 : i32
    %c0_i32_0 = arith.constant 0 : i32
    %c0_i32_1 = arith.constant 0 : i32
    return %c0_i32, %c0_i32_0 : i32, i32
  }
  func.func @transform_2(%arg0: i32) -> (i32, i32) {
    %c0_i32 = arith.constant 0 : i32
    %c0_i32_0 = arith.constant 0 : i32
    %c0_i32_1 = arith.constant 0 : i32
    return %c0_i32, %c0_i32_0 : i32, i32
  }
  func.func @transform_3(%arg0: i32) -> (i32, i32) {
    %c0_i32 = arith.constant 0 : i32
    %c0_i32_0 = arith.constant 0 : i32
    %c0_i32_1 = arith.constant 0 : i32
    return %c0_i32, %c0_i32_0 : i32, i32
  }
  func.func @transform_4(%arg0: i32) -> (i32, i32) {
    %c0_i32 = arith.constant 0 : i32
    %c0_i32_0 = arith.constant 0 : i32
    %c0_i32_1 = arith.constant 0 : i32
    return %c0_i32, %c0_i32_0 : i32, i32
  }
  func.func @transform_5(%arg0: i32) -> (i32, i32) {
    %c0_i32 = arith.constant 0 : i32
    %c0_i32_0 = arith.constant 0 : i32
    return %arg0, %c0_i32 : i32, i32
  }
}

module attributes {stable_mosaic.version = 11 : i64} {
  func.func @kernel(%arg0: i32, %arg1: memref<16x64xf32, #tpu.memory_space<vmem>>, %arg2: memref<64x256xf32, #tpu.memory_space<vmem>>, %arg3: memref<1x256xf32, #tpu.memory_space<vmem>>, %arg4: memref<256x64xf32, #tpu.memory_space<vmem>>, %arg5: memref<1x64xf32, #tpu.memory_space<vmem>>, %arg6: memref<16x64xf32, #tpu.memory_space<vmem>>) attributes {dimension_semantics = [#tpu.dimension_semantics<parallel>], iteration_bounds = array<i64: 1>, scalar_prefetch = 0 : i64, scratch_operands = 0 : i64, tpu.core_type = #tpu.core_type<tc>, window_params = [{transform_indices = @transform_0, window_bounds = array<i64: 16, 64>}, {pipeline_mode = #tpu.pipeline_mode<synchronous>, transform_indices = @transform_1, window_bounds = array<i64: 64, 256>}, {pipeline_mode = #tpu.pipeline_mode<synchronous>, transform_indices = @transform_2, window_bounds = array<i64: 1, 256>}, {pipeline_mode = #tpu.pipeline_mode<synchronous>, transform_indices = @transform_3, window_bounds = array<i64: 256, 64>}, {pipeline_mode = #tpu.pipeline_mode<synchronous>, transform_indices = @transform_4, window_bounds = array<i64: 1, 64>}, {transform_indices = @transform_5, window_bounds = array<i64: 16, 64>}]} {
    %c0 = arith.constant 0 : index
    %c0_0 = arith.constant 0 : index
    %0 = vector.load %arg1[%c0, %c0_0] : memref<16x64xf32, #tpu.memory_space<vmem>>, vector<16x64xf32>
    %c0_1 = arith.constant 0 : index
    %c0_2 = arith.constant 0 : index
    %1 = vector.load %arg2[%c0_1, %c0_2] : memref<64x256xf32, #tpu.memory_space<vmem>>, vector<64x256xf32>
    %cst = arith.constant dense<0.000000e+00> : vector<16x256xf32>
    %2 = tpu.matmul %0, %1, %cst {dimension_numbers = #tpu.dot_dimension_numbers<[1], [0], [0], [1], [0, 0, 1, 1], [], []>} : vector<16x64xf32>, vector<64x256xf32>, vector<16x256xf32> -> vector<16x256xf32>
    %c0_3 = arith.constant 0 : index
    %c0_4 = arith.constant 0 : index
    %3 = vector.load %arg3[%c0_3, %c0_4] : memref<1x256xf32, #tpu.memory_space<vmem>>, vector<1x256xf32>
    %4 = vector.broadcast %3 : vector<1x256xf32> to vector<16x256xf32>
    %5 = arith.addf %2, %4 : vector<16x256xf32>
    %cst_5 = arith.constant 5.000000e-01 : f32
    %6 = vector.broadcast %cst_5 : f32 to vector<16x256xf32>
    %7 = arith.mulf %6, %5 : vector<16x256xf32>
    %cst_6 = arith.constant 4.471500e-02 : f32
    %8 = vector.broadcast %cst_6 : f32 to vector<16x256xf32>
    %9 = arith.mulf %8, %5 : vector<16x256xf32>
    %10 = arith.mulf %9, %5 : vector<16x256xf32>
    %11 = arith.mulf %10, %5 : vector<16x256xf32>
    %12 = arith.addf %5, %11 : vector<16x256xf32>
    %cst_7 = arith.constant 0.797884583 : f32
    %13 = vector.broadcast %cst_7 : f32 to vector<16x256xf32>
    %14 = arith.mulf %13, %12 : vector<16x256xf32>
    %15 = math.tanh %14 : vector<16x256xf32>
    %cst_8 = arith.constant 1.000000e+00 : f32
    %16 = vector.broadcast %cst_8 : f32 to vector<16x256xf32>
    %17 = arith.addf %16, %15 : vector<16x256xf32>
    %18 = arith.mulf %7, %17 : vector<16x256xf32>
    %c0_9 = arith.constant 0 : index
    %c0_10 = arith.constant 0 : index
    %19 = vector.load %arg4[%c0_9, %c0_10] : memref<256x64xf32, #tpu.memory_space<vmem>>, vector<256x64xf32>
    %cst_11 = arith.constant dense<0.000000e+00> : vector<16x64xf32>
    %20 = tpu.matmul %18, %19, %cst_11 {dimension_numbers = #tpu.dot_dimension_numbers<[1], [0], [0], [1], [0, 0, 1, 1], [], []>} : vector<16x256xf32>, vector<256x64xf32>, vector<16x64xf32> -> vector<16x64xf32>
    %c0_12 = arith.constant 0 : index
    %c0_13 = arith.constant 0 : index
    %21 = vector.load %arg5[%c0_12, %c0_13] : memref<1x64xf32, #tpu.memory_space<vmem>>, vector<1x64xf32>
    %22 = vector.broadcast %21 : vector<1x64xf32> to vector<16x64xf32>
    %23 = arith.addf %20, %22 : vector<16x64xf32>
    %c0_14 = arith.constant 0 : index
    %c0_15 = arith.constant 0 : index
    %24 = vector.load %arg6[%c0_14, %c0_15] : memref<16x64xf32, #tpu.memory_space<vmem>>, vector<16x64xf32>
    tpu.vector_store %arg6[%c0_14, %c0_15], %23 {strides = array<i32>} : memref<16x64xf32, #tpu.memory_space<vmem>>, vector<16x64xf32>,
    return
  }
  func.func @transform_0(%arg0: i32) -> (i32, i32) {
    %c0_i32 = arith.constant 0 : i32
    %c0_i32_0 = arith.constant 0 : i32
    return %arg0, %c0_i32 : i32, i32
  }
  func.func @transform_1(%arg0: i32) -> (i32, i32) {
    %c0_i32 = arith.constant 0 : i32
    %c0_i32_0 = arith.constant 0 : i32
    %c0_i32_1 = arith.constant 0 : i32
    return %c0_i32, %c0_i32_0 : i32, i32
  }
  func.func @transform_2(%arg0: i32) -> (i32, i32) {
    %c0_i32 = arith.constant 0 : i32
    %c0_i32_0 = arith.constant 0 : i32
    %c0_i32_1 = arith.constant 0 : i32
    return %c0_i32, %c0_i32_0 : i32, i32
  }
  func.func @transform_3(%arg0: i32) -> (i32, i32) {
    %c0_i32 = arith.constant 0 : i32
    %c0_i32_0 = arith.constant 0 : i32
    %c0_i32_1 = arith.constant 0 : i32
    return %c0_i32, %c0_i32_0 : i32, i32
  }
  func.func @transform_4(%arg0: i32) -> (i32, i32) {
    %c0_i32 = arith.constant 0 : i32
    %c0_i32_0 = arith.constant 0 : i32
    %c0_i32_1 = arith.constant 0 : i32
    return %c0_i32, %c0_i32_0 : i32, i32
  }
  func.func @transform_5(%arg0: i32) -> (i32, i32) {
    %c0_i32 = arith.constant 0 : i32
    %c0_i32_0 = arith.constant 0 : i32
    return %arg0, %c0_i32 : i32, i32
  }
}

</mosaic_0001>

<llo_original>
// kernel: tpu_custom_call.1
$region0: #{tpu_custom_call.1}
  #allocation0 [shape = 'u32[]', space=smem, size = 0x4, offset = 0x4, fixed_abs, tag = 'smem constant byte address 0x4 - core index']
  #allocation1 [shape = 'u32[144,128]{1,0:T(1,128)}', space=vmem, size = 0x12000, scoped, tag = 'internal scratch']
  %s0 = inlined_call_operand.vmem [shape: f32[16,64], index: 0, kind: input, shape index: {}]
  %s1 = inlined_call_operand.vmem [shape: f32[64,256], index: 1, kind: input, shape index: {}]
  %s2 = inlined_call_operand.vmem [shape: f32[1,256], index: 2, kind: input, shape index: {}]
  %s3 = inlined_call_operand.vmem [shape: f32[256,64], index: 3, kind: input, shape index: {}]
  %s4 = inlined_call_operand.vmem [shape: f32[1,64], index: 4, kind: input, shape index: {}]
  %s5 = inlined_call_operand.hbm [shape: f32[16,64], index: 5, kind: output, shape index: {}]
  %s6 = sld [smem:[#allocation0]]
  $region30: #{tpu_custom_call.1} parent=0
    _
  %s8 = ssub.s32 1, %s6
  %s9 = scalar_select 0, %s8, %s6
  $region1: #{tpu_custom_call.1} parent=0
    #allocation2 [shape = 'u8[8192]{0}', space=vmem, size = 0x2000, scoped, tag = 'output window, operand 0, single buffered']
    #allocation3 [shape = 's32[1]{0}', space=sflag, size = 0x4, scoped, tag = 'scoped memory for tpu_custom_call.1']
    %10 = vsyncpa [#allocation3], 0
    // Predicated region
    $region2: #{tpu_custom_call.1} parent=1 // pred_check
      _
    $region3: #{tpu_custom_call.1} parent=1 // pred_check_branch
      %12 = sbr.rel (0) target = $region5
    $region4: #{tpu_custom_call.1} parent=1 // pred_region
      _
    $region5: #{tpu_custom_call.1} parent=1 // pred_fallthru
      _
    // Predicated region
    $region6: #{tpu_custom_call.1} parent=1 // pred_check
      _
    $region7: #{tpu_custom_call.1} parent=1 // pred_check_branch
      %14 = sbr.rel (0) target = $region9
    $region8: #{tpu_custom_call.1} parent=1 // pred_region
      _
    $region9: #{tpu_custom_call.1} parent=1 // pred_fallthru
      _
    // Predicated region
    $region10: #{tpu_custom_call.1} parent=1 // pred_check
      _
    $region11: #{tpu_custom_call.1} parent=1 // pred_check_branch
      %16 = sbr.rel (0) target = $region13
    $region12: #{tpu_custom_call.1} parent=1 // pred_region
      _
    $region13: #{tpu_custom_call.1} parent=1 // pred_fallthru
      _
    // Predicated region
    $region14: #{tpu_custom_call.1} parent=1 // pred_check
      _
    $region15: #{tpu_custom_call.1} parent=1 // pred_check_branch
      %18 = sbr.rel (0) target = $region17
    $region16: #{tpu_custom_call.1} parent=1 // pred_region
      _
    $region17: #{tpu_custom_call.1} parent=1 // pred_fallthru
      _
    // Predicated region
    $region18: #{tpu_custom_call.1} parent=1 // pred_check
      _
    $region19: #{tpu_custom_call.1} parent=1 // pred_check_branch
      %20 = sbr.rel (0) target = $region21
    $region20: #{tpu_custom_call.1} parent=1 // pred_region
      _
    $region21: #{tpu_custom_call.1} parent=1 // pred_fallthru
      _
    %v21 = vld [vmem:[%s0] sm:$0xff]
    %v22 = vld [vmem:[%s0 + $0x8] sm:$0xff]
    %v23 = vld [vmem:[%s1] sm:$0xff]
    %v24 = vld [vmem:[%s1 + $0x8] sm:$0xff]
    %v25 = vld [vmem:[%s1 + $0x10] sm:$0xff]
    %v26 = vld [vmem:[%s1 + $0x18] sm:$0xff]
    %v27 = vld [vmem:[%s1 + $0x20] sm:$0xff]
    %v28 = vld [vmem:[%s1 + $0x28] sm:$0xff]
    %v29 = vld [vmem:[%s1 + $0x30] sm:$0xff]
    %v30 = vld [vmem:[%s1 + $0x38] sm:$0xff]
    %v31 = vld [vmem:[%s1 + $0x40] sm:$0xff]
    %v32 = vld [vmem:[%s1 + $0x48] sm:$0xff]
    %v33 = vld [vmem:[%s1 + $0x50] sm:$0xff]
    %v34 = vld [vmem:[%s1 + $0x58] sm:$0xff]
    %v35 = vld [vmem:[%s1 + $0x60] sm:$0xff]
    %v36 = vld [vmem:[%s1 + $0x68] sm:$0xff]
    %v37 = vld [vmem:[%s1 + $0x70] sm:$0xff]
    %v38 = vld [vmem:[%s1 + $0x78] sm:$0xff]
    %v39 = vld [vmem:[%s2] sm:$0x3]
    %v41 = vlaneseq
    %v42 = vshrl.u32 %v41, 7
    %v43 = vsub.s32 0, %v42
    %v44 = vrot.slane %v39, %v43
    %v45 = vlaneseq
    %v46 = vshrl.u32 %v45, 7
    %v47 = vsub.s32 1, %v46
    %v48 = vrot.slane %v39, %v47
    %vm51 = vcmask 523264
    %v53 = vsel %vm51, %v21, 0
    %v56 = vsel %vm51, %v22, 0
    %58 = vmatprep.subr.mxu0 0.0
    %59 = vmatpush1.msra.mxu0 0.0
    %60 = vmatprep.subr.mxu0 0.0
    %61 = vmatpush1.msra.mxu0 0.0
    %62 = vmatprep.subr.mxu0 0.0
    %63 = vmatpush1.msra.mxu0 0.0
    %64 = vmatprep.subr.mxu0 0.0
    %65 = vmatpush1.msra.mxu0 0.0
    %66 = vmatprep.subr.mxu0 0.0
    %67 = vmatpush1.msra.mxu0 0.0
    %68 = vmatprep.subr.mxu0 0.0
    %69 = vmatpush1.msra.mxu0 0.0
    %70 = vmatprep.subr.mxu0 0.0
    %71 = vmatpush1.msra.mxu0 0.0
    %72 = vmatprep.subr.mxu0 0.0
    %73 = vmatpush1.msra.mxu0 0.0
    %74 = vmatprep.subr.mxu0 %v38
    %75 = vmatpush1.msra.mxu0 %v37
    %76 = vmatprep.subr.mxu0 %v36
    %77 = vmatpush1.msra.mxu0 %v35
    %78 = vmatprep.subr.mxu0 %v34
    %79 = vmatpush1.msra.mxu0 %v33
    %80 = vmatprep.subr.mxu0 %v32
    %81 = vmatpush1.msra.mxu0 %v31
    %82 = vmatprep.subr.mxu0 %v30
    %83 = vmatpush1.msra.mxu0 %v29
    %84 = vmatprep.subr.mxu0 %v28
    %85 = vmatpush1.msra.mxu0 %v27
    %86 = vmatprep.subr.mxu0 %v26
    %87 = vmatpush1.msra.mxu0 %v25
    %88 = vmatprep.subr.mxu0 %v24
    %89 = vmatpush1.msra.mxu0 %v23
    %90 = vmatprep.subr.mxu0 0.0
    %91 = vmatpush2.msra.mxu0 0.0
    %92 = vmatprep.subr.mxu0 0.0
    %93 = vmatpush2.msra.mxu0 0.0
    %94 = vmatprep.subr.mxu0 0.0
    %95 = vmatpush2.msra.mxu0 0.0
    %96 = vmatprep.subr.mxu0 0.0
    %97 = vmatpush2.msra.mxu0 0.0
    %98 = vmatprep.subr.mxu0 0.0
    %99 = vmatpush2.msra.mxu0 0.0
    %100 = vmatprep.subr.mxu0 0.0
    %101 = vmatpush2.msra.mxu0 0.0
    %102 = vmatprep.subr.mxu0 0.0
    %103 = vmatpush2.msra.mxu0 0.0
    %104 = vmatprep.subr.mxu0 0.0
    %105 = vmatpush2.msra.mxu0 0.0
    %106 = vmatprep.subr.mxu0 0.0
    %107 = vmatpush2.msra.mxu0 0.0
    %108 = vmatprep.subr.mxu0 0.0
    %109 = vmatpush2.msra.mxu0 0.0
    %110 = vmatprep.subr.mxu0 0.0
    %111 = vmatpush2.msra.mxu0 0.0
    %112 = vmatprep.subr.mxu0 0.0
    %113 = vmatpush2.msra.mxu0 0.0
    %114 = vmatprep.subr.mxu0 0.0
    %115 = vmatpush2.msra.mxu0 0.0
    %116 = vmatprep.subr.mxu0 0.0
    %117 = vmatpush2.msra.mxu0 0.0
    %118 = vmatprep.subr.mxu0 0.0
    %119 = vmatpush2.msra.mxu0 0.0
    %120 = vmatprep.subr.mxu0 0.0
    %121 = vmatpush2.msra.mxu0 0.0
    %122 = vmatprep.mubr.f32.mxu0 0.0
    %123 = vmatmul.mubr.f32.gmra.mxu0 %v53
    %v124 = vpop.f32.mrf.mxu0
    %v125 = vadd.f32 %v44, %v124
    %v126 = vpop.f32.mrf.mxu0
    %v127 = vadd.f32 %v48, %v126
    %128 = vmatprep.mubr.f32.mxu0 0.0
    %129 = vmatmul.mubr.f32.gmra.mxu0 %v56
    %v130 = vpop.f32.mrf.mxu0
    %v131 = vadd.f32 %v44, %v130
    %v132 = vpop.f32.mrf.mxu0
    %v133 = vadd.f32 %v48, %v132
    %134 = vdwg.mxu0
    %v135 = vmul.f32 %v125, 0.5
    %v136 = vmul.f32 %v127, 0.5
    %v137 = vmul.f32 %v131, 0.5
    %v138 = vmul.f32 %v133, 0.5
    %v139 = vmul.f32 %v125, 0.044715
    %v140 = vmul.f32 %v127, 0.044715
    %v141 = vmul.f32 %v131, 0.044715
    %v142 = vmul.f32 %v133, 0.044715
    %v143 = vmul.f32 %v139, %v125
    %v144 = vmul.f32 %v140, %v127
    %v145 = vmul.f32 %v141, %v131
    %v146 = vmul.f32 %v142, %v133
    %v147 = vmul.f32 %v143, %v125
    %v148 = vmul.f32 %v144, %v127
    %v149 = vmul.f32 %v145, %v131
    %v150 = vmul.f32 %v146, %v133
    %v151 = vadd.f32 %v125, %v147
    %v152 = vadd.f32 %v127, %v148
    %v153 = vadd.f32 %v131, %v149
    %v154 = vadd.f32 %v133, %v150
    %v155 = vmul.f32 %v151, 0.7978846
    %v156 = vmul.f32 %v152, 0.7978846
    %v157 = vmul.f32 %v153, 0.7978846
    %v158 = vmul.f32 %v154, 0.7978846
    %v159 = vtanh.pop %v155
    %v160 = vtanh.pop %v156
    %v161 = vtanh.pop %v157
    %v162 = vtanh.pop %v158
    %v163 = vadd.f32 %v159, 1.0
    %v164 = vadd.f32 %v160, 1.0
    %v165 = vadd.f32 %v161, 1.0
    %v166 = vadd.f32 %v162, 1.0
    %v167 = vmul.f32 %v135, %v163
    %v168 = vmul.f32 %v136, %v164
    %v169 = vmul.f32 %v137, %v165
    %v170 = vmul.f32 %v138, %v166
    %v171 = vld [vmem:[%s3] sm:$0xff]
    %v172 = vld [vmem:[%s3 + $0x8] sm:$0xff]
    %v173 = vld [vmem:[%s3 + $0x10] sm:$0xff]
    %v174 = vld [vmem:[%s3 + $0x18] sm:$0xff]
    %v175 = vld [vmem:[%s3 + $0x20] sm:$0xff]
    %v176 = vld [vmem:[%s3 + $0x28] sm:$0xff]
    %v177 = vld [vmem:[%s3 + $0x30] sm:$0xff]
    %v178 = vld [vmem:[%s3 + $0x38] sm:$0xff]
    %v179 = vld [vmem:[%s3 + $0x40] sm:$0xff]
    %v180 = vld [vmem:[%s3 + $0x48] sm:$0xff]
    %v181 = vld [vmem:[%s3 + $0x50] sm:$0xff]
    %v182 = vld [vmem:[%s3 + $0x58] sm:$0xff]
    %v183 = vld [vmem:[%s3 + $0x60] sm:$0xff]
    %v184 = vld [vmem:[%s3 + $0x68] sm:$0xff]
    %v185 = vld [vmem:[%s3 + $0x70] sm:$0xff]
    %v186 = vld [vmem:[%s3 + $0x78] sm:$0xff]
    %v187 = vld [vmem:[%s3 + $0x80] sm:$0xff]
    %v188 = vld [vmem:[%s3 + $0x88] sm:$0xff]
    %v189 = vld [vmem:[%s3 + $0x90] sm:$0xff]
    %v190 = vld [vmem:[%s3 + $0x98] sm:$0xff]
    %v191 = vld [vmem:[%s3 + $0xa0] sm:$0xff]
    %v192 = vld [vmem:[%s3 + $0xa8] sm:$0xff]
    %v193 = vld [vmem:[%s3 + $0xb0] sm:$0xff]
    %v194 = vld [vmem:[%s3 + $0xb8] sm:$0xff]
    %v195 = vld [vmem:[%s3 + $0xc0] sm:$0xff]
    %v196 = vld [vmem:[%s3 + $0xc8] sm:$0xff]
    %v197 = vld [vmem:[%s3 + $0xd0] sm:$0xff]
    %v198 = vld [vmem:[%s3 + $0xd8] sm:$0xff]
    %v199 = vld [vmem:[%s3 + $0xe0] sm:$0xff]
    %v200 = vld [vmem:[%s3 + $0xe8] sm:$0xff]
    %v201 = vld [vmem:[%s3 + $0xf0] sm:$0xff]
    %v202 = vld [vmem:[%s3 + $0xf8] sm:$0xff]
    %v203 = vld [vmem:[%s4] sm:$0x1]
    %v205 = vlaneseq
    %v206 = vshrl.u32 %v205, 7
    %v207 = vsub.s32 0, %v206
    %v208 = vrot.slane %v203, %v207
    %210 = vmatprep.subr.mxu0 0.0
    %211 = vmatpush1.msra.mxu0 %v186
    %212 = vmatprep.subr.mxu0 0.0
    %213 = vmatpush1.msra.mxu0 %v185
    %214 = vmatprep.subr.mxu0 0.0
    %215 = vmatpush1.msra.mxu0 %v184
    %216 = vmatprep.subr.mxu0 0.0
    %217 = vmatpush1.msra.mxu0 %v183
    %218 = vmatprep.subr.mxu0 0.0
    %219 = vmatpush1.msra.mxu0 %v182
    %220 = vmatprep.subr.mxu0 0.0
    %221 = vmatpush1.msra.mxu0 %v181
    %222 = vmatprep.subr.mxu0 0.0
    %223 = vmatpush1.msra.mxu0 %v180
    %224 = vmatprep.subr.mxu0 0.0
    %225 = vmatpush1.msra.mxu0 %v179
    %226 = vmatprep.subr.mxu0 0.0
    %227 = vmatpush1.msra.mxu0 %v178
    %228 = vmatprep.subr.mxu0 0.0
    %229 = vmatpush1.msra.mxu0 %v177
    %230 = vmatprep.subr.mxu0 0.0
    %231 = vmatpush1.msra.mxu0 %v176
    %232 = vmatprep.subr.mxu0 0.0
    %233 = vmatpush1.msra.mxu0 %v175
    %234 = vmatprep.subr.mxu0 0.0
    %235 = vmatpush1.msra.mxu0 %v174
    %236 = vmatprep.subr.mxu0 0.0
    %237 = vmatpush1.msra.mxu0 %v173
    %238 = vmatprep.subr.mxu0 0.0
    %239 = vmatpush1.msra.mxu0 %v172
    %240 = vmatprep.subr.mxu0 0.0
    %241 = vmatpush1.msra.mxu0 %v171
    %242 = vmatprep.subr.mxu0 0.0
    %243 = vmatpush2.msra.mxu0 %v202
    %244 = vmatprep.subr.mxu0 0.0
    %245 = vmatpush2.msra.mxu0 %v201
    %246 = vmatprep.subr.mxu0 0.0
    %247 = vmatpush2.msra.mxu0 %v200
    %248 = vmatprep.subr.mxu0 0.0
    %249 = vmatpush2.msra.mxu0 %v199
    %250 = vmatprep.subr.mxu0 0.0
    %251 = vmatpush2.msra.mxu0 %v198
    %252 = vmatprep.subr.mxu0 0.0
    %253 = vmatpush2.msra.mxu0 %v197
    %254 = vmatprep.subr.mxu0 0.0
    %255 = vmatpush2.msra.mxu0 %v196
    %256 = vmatprep.subr.mxu0 0.0
    %257 = vmatpush2.msra.mxu0 %v195
    %258 = vmatprep.subr.mxu0 0.0
    %259 = vmatpush2.msra.mxu0 %v194
    %260 = vmatprep.subr.mxu0 0.0
    %261 = vmatpush2.msra.mxu0 %v193
    %262 = vmatprep.subr.mxu0 0.0
    %263 = vmatpush2.msra.mxu0 %v192
    %264 = vmatprep.subr.mxu0 0.0
    %265 = vmatpush2.msra.mxu0 %v191
    %266 = vmatprep.subr.mxu0 0.0
    %267 = vmatpush2.msra.mxu0 %v190
    %268 = vmatprep.subr.mxu0 0.0
    %269 = vmatpush2.msra.mxu0 %v189
    %270 = vmatprep.subr.mxu0 0.0
    %271 = vmatpush2.msra.mxu0 %v188
    %272 = vmatprep.subr.mxu0 0.0
    %273 = vmatpush2.msra.mxu0 %v187
    %274 = vmatprep.mubr.f32.mxu0 %v168
    %275 = vmatmul.mubr.f32.gmra.mxu0 %v167
    %v276 = vpop.f32.mrf.mxu0
    %v277 = vadd.f32 %v208, %v276
    %v278 = vpop.f32.mrf.mxu0
    %279 = vmatprep.mubr.f32.mxu0 %v170
    %280 = vmatmul.mubr.f32.gmra.mxu0 %v169
    %v281 = vpop.f32.mrf.mxu0
    %v282 = vadd.f32 %v208, %v281
    %v283 = vpop.f32.mrf.mxu0
    %284 = vdwg.mxu0
    %285 = vst.msk [vmem:[#allocation2] sm:$0xff] %vm51, %v277
    %286 = vst.msk [vmem:[#allocation2 + $0x8] sm:$0xff] %vm51, %v282
    // Predicated region
    $region22: #{tpu_custom_call.1} parent=1 // pred_check
      _
    $region23: #{tpu_custom_call.1} parent=1 // pred_check_branch
      %288 = sbr.rel (0) target = $region25
    $region24: #{tpu_custom_call.1} parent=1 // pred_region
      %s290 = ssub.s32 256, 256
      %291 = vsyncadd [#allocation3], %s290
      %s292 = sshll.u32 [#allocation2], 4
      %s293 = int_to_ptr.vmem [resolvable:$true] %s292
      %298 = dma.vmem_to_hbm [thread:$0]  %s293, 256, %s5, [#allocation3], 128, 128, 8
    $region25: #{tpu_custom_call.1} parent=1 // pred_fallthru
      _
    // Predicated region
    $region26: #{tpu_custom_call.1} parent=1 // pred_check
      _
    $region27: #{tpu_custom_call.1} parent=1 // pred_check_branch
      %300 = sbr.rel (0) target = $region29
    $region28: #{tpu_custom_call.1} parent=1 // pred_region
      %301 = dma.done [#allocation3], 256
    $region29: #{tpu_custom_call.1} parent=1 // pred_fallthru
      _
    %302 = vsyncpa [#allocation3], 1

// kernel: tpu_custom_call.1
$region0: #{tpu_custom_call.1}
  #allocation0 [shape = 'u32[]', space=smem, size = 0x4, offset = 0x4, fixed_abs, tag = 'smem constant byte address 0x4 - core index']
  #allocation1 [shape = 'u32[144,128]{1,0:T(1,128)}', space=vmem, size = 0x12000, scoped, tag = 'internal scratch']
  %s0 = inlined_call_operand.vmem [shape: f32[16,64], index: 0, kind: input, shape index: {}]
  %s1 = inlined_call_operand.vmem [shape: f32[64,256], index: 1, kind: input, shape index: {}]
  %s2 = inlined_call_operand.vmem [shape: f32[1,256], index: 2, kind: input, shape index: {}]
  %s3 = inlined_call_operand.vmem [shape: f32[256,64], index: 3, kind: input, shape index: {}]
  %s4 = inlined_call_operand.vmem [shape: f32[1,64], index: 4, kind: input, shape index: {}]
  %s5 = inlined_call_operand.hbm [shape: f32[16,64], index: 5, kind: output, shape index: {}]
  %s6 = sld [smem:[#allocation0]]
  $region30: #{tpu_custom_call.1} parent=0
    _
  %s8 = ssub.s32 1, %s6
  %s9 = scalar_select 0, %s8, %s6
  $region1: #{tpu_custom_call.1} parent=0
    #allocation2 [shape = 'u8[8192]{0}', space=vmem, size = 0x2000, scoped, tag = 'output window, operand 0, single buffered']
    #allocation3 [shape = 's32[1]{0}', space=sflag, size = 0x4, scoped, tag = 'scoped memory for tpu_custom_call.1']
    %10 = vsyncpa [#allocation3], 0
    // Predicated region
    $region2: #{tpu_custom_call.1} parent=1 // pred_check
      _
    $region3: #{tpu_custom_call.1} parent=1 // pred_check_branch
      %12 = sbr.rel (0) target = $region5
    $region4: #{tpu_custom_call.1} parent=1 // pred_region
      _
    $region5: #{tpu_custom_call.1} parent=1 // pred_fallthru
      _
    // Predicated region
    $region6: #{tpu_custom_call.1} parent=1 // pred_check
      _
    $region7: #{tpu_custom_call.1} parent=1 // pred_check_branch
      %14 = sbr.rel (0) target = $region9
    $region8: #{tpu_custom_call.1} parent=1 // pred_region
      _
    $region9: #{tpu_custom_call.1} parent=1 // pred_fallthru
      _
    // Predicated region
    $region10: #{tpu_custom_call.1} parent=1 // pred_check
      _
    $region11: #{tpu_custom_call.1} parent=1 // pred_check_branch
      %16 = sbr.rel (0) target = $region13
    $region12: #{tpu_custom_call.1} parent=1 // pred_region
      _
    $region13: #{tpu_custom_call.1} parent=1 // pred_fallthru
      _
    // Predicated region
    $region14: #{tpu_custom_call.1} parent=1 // pred_check
      _
    $region15: #{tpu_custom_call.1} parent=1 // pred_check_branch
      %18 = sbr.rel (0) target = $region17
    $region16: #{tpu_custom_call.1} parent=1 // pred_region
      _
    $region17: #{tpu_custom_call.1} parent=1 // pred_fallthru
      _
    // Predicated region
    $region18: #{tpu_custom_call.1} parent=1 // pred_check
      _
    $region19: #{tpu_custom_call.1} parent=1 // pred_check_branch
      %20 = sbr.rel (0) target = $region21
    $region20: #{tpu_custom_call.1} parent=1 // pred_region
      _
    $region21: #{tpu_custom_call.1} parent=1 // pred_fallthru
      _
    %v21 = vld [vmem:[%s0] sm:$0xff]
    %v22 = vld [vmem:[%s0 + $0x8] sm:$0xff]
    %v23 = vld [vmem:[%s1] sm:$0xff]
    %v24 = vld [vmem:[%s1 + $0x8] sm:$0xff]
    %v25 = vld [vmem:[%s1 + $0x10] sm:$0xff]
    %v26 = vld [vmem:[%s1 + $0x18] sm:$0xff]
    %v27 = vld [vmem:[%s1 + $0x20] sm:$0xff]
    %v28 = vld [vmem:[%s1 + $0x28] sm:$0xff]
    %v29 = vld [vmem:[%s1 + $0x30] sm:$0xff]
    %v30 = vld [vmem:[%s1 + $0x38] sm:$0xff]
    %v31 = vld [vmem:[%s1 + $0x40] sm:$0xff]
    %v32 = vld [vmem:[%s1 + $0x48] sm:$0xff]
    %v33 = vld [vmem:[%s1 + $0x50] sm:$0xff]
    %v34 = vld [vmem:[%s1 + $0x58] sm:$0xff]
    %v35 = vld [vmem:[%s1 + $0x60] sm:$0xff]
    %v36 = vld [vmem:[%s1 + $0x68] sm:$0xff]
    %v37 = vld [vmem:[%s1 + $0x70] sm:$0xff]
    %v38 = vld [vmem:[%s1 + $0x78] sm:$0xff]
    %v39 = vld [vmem:[%s2] sm:$0x3]
    %v41 = vlaneseq
    %v42 = vshrl.u32 %v41, 7
    %v43 = vsub.s32 0, %v42
    %v44 = vrot.slane %v39, %v43
    %v45 = vlaneseq
    %v46 = vshrl.u32 %v45, 7
    %v47 = vsub.s32 1, %v46
    %v48 = vrot.slane %v39, %v47
    %vm51 = vcmask 523264
    %v53 = vsel %vm51, %v21, 0
    %v56 = vsel %vm51, %v22, 0
    %58 = vmatprep.subr.mxu0 0.0
    %59 = vmatpush1.msra.mxu0 0.0
    %60 = vmatprep.subr.mxu0 0.0
    %61 = vmatpush1.msra.mxu0 0.0
    %62 = vmatprep.subr.mxu0 0.0
    %63 = vmatpush1.msra.mxu0 0.0
    %64 = vmatprep.subr.mxu0 0.0
    %65 = vmatpush1.msra.mxu0 0.0
    %66 = vmatprep.subr.mxu0 0.0
    %67 = vmatpush1.msra.mxu0 0.0
    %68 = vmatprep.subr.mxu0 0.0
    %69 = vmatpush1.msra.mxu0 0.0
    %70 = vmatprep.subr.mxu0 0.0
    %71 = vmatpush1.msra.mxu0 0.0
    %72 = vmatprep.subr.mxu0 0.0
    %73 = vmatpush1.msra.mxu0 0.0
    %74 = vmatprep.subr.mxu0 %v38
    %75 = vmatpush1.msra.mxu0 %v37
    %76 = vmatprep.subr.mxu0 %v36
    %77 = vmatpush1.msra.mxu0 %v35
    %78 = vmatprep.subr.mxu0 %v34
    %79 = vmatpush1.msra.mxu0 %v33
    %80 = vmatprep.subr.mxu0 %v32
    %81 = vmatpush1.msra.mxu0 %v31
    %82 = vmatprep.subr.mxu0 %v30
    %83 = vmatpush1.msra.mxu0 %v29
    %84 = vmatprep.subr.mxu0 %v28
    %85 = vmatpush1.msra.mxu0 %v27
    %86 = vmatprep.subr.mxu0 %v26
    %87 = vmatpush1.msra.mxu0 %v25
    %88 = vmatprep.subr.mxu0 %v24
    %89 = vmatpush1.msra.mxu0 %v23
    %90 = vmatprep.subr.mxu0 0.0
    %91 = vmatpush2.msra.mxu0 0.0
    %92 = vmatprep.subr.mxu0 0.0
    %93 = vmatpush2.msra.mxu0 0.0
    %94 = vmatprep.subr.mxu0 0.0
    %95 = vmatpush2.msra.mxu0 0.0
    %96 = vmatprep.subr.mxu0 0.0
    %97 = vmatpush2.msra.mxu0 0.0
    %98 = vmatprep.subr.mxu0 0.0
    %99 = vmatpush2.msra.mxu0 0.0
    %100 = vmatprep.subr.mxu0 0.0
    %101 = vmatpush2.msra.mxu0 0.0
    %102 = vmatprep.subr.mxu0 0.0
    %103 = vmatpush2.msra.mxu0 0.0
    %104 = vmatprep.subr.mxu0 0.0
    %105 = vmatpush2.msra.mxu0 0.0
    %106 = vmatprep.subr.mxu0 0.0
    %107 = vmatpush2.msra.mxu0 0.0
    %108 = vmatprep.subr.mxu0 0.0
    %109 = vmatpush2.msra.mxu0 0.0
    %110 = vmatprep.subr.mxu0 0.0
    %111 = vmatpush2.msra.mxu0 0.0
    %112 = vmatprep.subr.mxu0 0.0
    %113 = vmatpush2.msra.mxu0 0.0
    %114 = vmatprep.subr.mxu0 0.0
    %115 = vmatpush2.msra.mxu0 0.0
    %116 = vmatprep.subr.mxu0 0.0
    %117 = vmatpush2.msra.mxu0 0.0
    %118 = vmatprep.subr.mxu0 0.0
    %119 = vmatpush2.msra.mxu0 0.0
    %120 = vmatprep.subr.mxu0 0.0
    %121 = vmatpush2.msra.mxu0 0.0
    %122 = vmatprep.mubr.f32.mxu0 0.0
    %123 = vmatmul.mubr.f32.gmra.mxu0 %v53
    %v124 = vpop.f32.mrf.mxu0
    %v125 = vadd.f32 %v44, %v124
    %v126 = vpop.f32.mrf.mxu0
    %v127 = vadd.f32 %v48, %v126
    %128 = vmatprep.mubr.f32.mxu0 0.0
    %129 = vmatmul.mubr.f32.gmra.mxu0 %v56
    %v130 = vpop.f32.mrf.mxu0
    %v131 = vadd.f32 %v44, %v130
    %v132 = vpop.f32.mrf.mxu0
    %v133 = vadd.f32 %v48, %v132
    %134 = vdwg.mxu0
    %v135 = vmul.f32 %v125, 0.5
    %v136 = vmul.f32 %v127, 0.5
    %v137 = vmul.f32 %v131, 0.5
    %v138 = vmul.f32 %v133, 0.5
    %v139 = vmul.f32 %v125, 0.044715
    %v140 = vmul.f32 %v127, 0.044715
    %v141 = vmul.f32 %v131, 0.044715
    %v142 = vmul.f32 %v133, 0.044715
    %v143 = vmul.f32 %v139, %v125
    %v144 = vmul.f32 %v140, %v127
    %v145 = vmul.f32 %v141, %v131
    %v146 = vmul.f32 %v142, %v133
    %v147 = vmul.f32 %v143, %v125
    %v148 = vmul.f32 %v144, %v127
    %v149 = vmul.f32 %v145, %v131
    %v150 = vmul.f32 %v146, %v133
    %v151 = vadd.f32 %v125, %v147
    %v152 = vadd.f32 %v127, %v148
    %v153 = vadd.f32 %v131, %v149
    %v154 = vadd.f32 %v133, %v150
    %v155 = vmul.f32 %v151, 0.7978846
    %v156 = vmul.f32 %v152, 0.7978846
    %v157 = vmul.f32 %v153, 0.7978846
    %v158 = vmul.f32 %v154, 0.7978846
    %v159 = vtanh.pop %v155
    %v160 = vtanh.pop %v156
    %v161 = vtanh.pop %v157
    %v162 = vtanh.pop %v158
    %v163 = vadd.f32 %v159, 1.0
    %v164 = vadd.f32 %v160, 1.0
    %v165 = vadd.f32 %v161, 1.0
    %v166 = vadd.f32 %v162, 1.0
    %v167 = vmul.f32 %v135, %v163
    %v168 = vmul.f32 %v136, %v164
    %v169 = vmul.f32 %v137, %v165
    %v170 = vmul.f32 %v138, %v166
    %v171 = vld [vmem:[%s3] sm:$0xff]
    %v172 = vld [vmem:[%s3 + $0x8] sm:$0xff]
    %v173 = vld [vmem:[%s3 + $0x10] sm:$0xff]
    %v174 = vld [vmem:[%s3 + $0x18] sm:$0xff]
    %v175 = vld [vmem:[%s3 + $0x20] sm:$0xff]
    %v176 = vld [vmem:[%s3 + $0x28] sm:$0xff]
    %v177 = vld [vmem:[%s3 + $0x30] sm:$0xff]
    %v178 = vld [vmem:[%s3 + $0x38] sm:$0xff]
    %v179 = vld [vmem:[%s3 + $0x40] sm:$0xff]
    %v180 = vld [vmem:[%s3 + $0x48] sm:$0xff]
    %v181 = vld [vmem:[%s3 + $0x50] sm:$0xff]
    %v182 = vld [vmem:[%s3 + $0x58] sm:$0xff]
    %v183 = vld [vmem:[%s3 + $0x60] sm:$0xff]
    %v184 = vld [vmem:[%s3 + $0x68] sm:$0xff]
    %v185 = vld [vmem:[%s3 + $0x70] sm:$0xff]
    %v186 = vld [vmem:[%s3 + $0x78] sm:$0xff]
    %v187 = vld [vmem:[%s3 + $0x80] sm:$0xff]
    %v188 = vld [vmem:[%s3 + $0x88] sm:$0xff]
    %v189 = vld [vmem:[%s3 + $0x90] sm:$0xff]
    %v190 = vld [vmem:[%s3 + $0x98] sm:$0xff]
    %v191 = vld [vmem:[%s3 + $0xa0] sm:$0xff]
    %v192 = vld [vmem:[%s3 + $0xa8] sm:$0xff]
    %v193 = vld [vmem:[%s3 + $0xb0] sm:$0xff]
    %v194 = vld [vmem:[%s3 + $0xb8] sm:$0xff]
    %v195 = vld [vmem:[%s3 + $0xc0] sm:$0xff]
    %v196 = vld [vmem:[%s3 + $0xc8] sm:$0xff]
    %v197 = vld [vmem:[%s3 + $0xd0] sm:$0xff]
    %v198 = vld [vmem:[%s3 + $0xd8] sm:$0xff]
    %v199 = vld [vmem:[%s3 + $0xe0] sm:$0xff]
    %v200 = vld [vmem:[%s3 + $0xe8] sm:$0xff]
    %v201 = vld [vmem:[%s3 + $0xf0] sm:$0xff]
    %v202 = vld [vmem:[%s3 + $0xf8] sm:$0xff]
    %v203 = vld [vmem:[%s4] sm:$0x1]
    %v205 = vlaneseq
    %v206 = vshrl.u32 %v205, 7
    %v207 = vsub.s32 0, %v206
    %v208 = vrot.slane %v203, %v207
    %210 = vmatprep.subr.mxu0 0.0
    %211 = vmatpush1.msra.mxu0 %v186
    %212 = vmatprep.subr.mxu0 0.0
    %213 = vmatpush1.msra.mxu0 %v185
    %214 = vmatprep.subr.mxu0 0.0
    %215 = vmatpush1.msra.mxu0 %v184
    %216 = vmatprep.subr.mxu0 0.0
    %217 = vmatpush1.msra.mxu0 %v183
    %218 = vmatprep.subr.mxu0 0.0
    %219 = vmatpush1.msra.mxu0 %v182
    %220 = vmatprep.subr.mxu0 0.0
    %221 = vmatpush1.msra.mxu0 %v181
    %222 = vmatprep.subr.mxu0 0.0
    %223 = vmatpush1.msra.mxu0 %v180
    %224 = vmatprep.subr.mxu0 0.0
    %225 = vmatpush1.msra.mxu0 %v179
    %226 = vmatprep.subr.mxu0 0.0
    %227 = vmatpush1.msra.mxu0 %v178
    %228 = vmatprep.subr.mxu0 0.0
    %229 = vmatpush1.msra.mxu0 %v177
    %230 = vmatprep.subr.mxu0 0.0
    %231 = vmatpush1.msra.mxu0 %v176
    %232 = vmatprep.subr.mxu0 0.0
    %233 = vmatpush1.msra.mxu0 %v175
    %234 = vmatprep.subr.mxu0 0.0
    %235 = vmatpush1.msra.mxu0 %v174
    %236 = vmatprep.subr.mxu0 0.0
    %237 = vmatpush1.msra.mxu0 %v173
    %238 = vmatprep.subr.mxu0 0.0
    %239 = vmatpush1.msra.mxu0 %v172
    %240 = vmatprep.subr.mxu0 0.0
    %241 = vmatpush1.msra.mxu0 %v171
    %242 = vmatprep.subr.mxu0 0.0
    %243 = vmatpush2.msra.mxu0 %v202
    %244 = vmatprep.subr.mxu0 0.0
    %245 = vmatpush2.msra.mxu0 %v201
    %246 = vmatprep.subr.mxu0 0.0
    %247 = vmatpush2.msra.mxu0 %v200
    %248 = vmatprep.subr.mxu0 0.0
    %249 = vmatpush2.msra.mxu0 %v199
    %250 = vmatprep.subr.mxu0 0.0
    %251 = vmatpush2.msra.mxu0 %v198
    %252 = vmatprep.subr.mxu0 0.0
    %253 = vmatpush2.msra.mxu0 %v197
    %254 = vmatprep.subr.mxu0 0.0
    %255 = vmatpush2.msra.mxu0 %v196
    %256 = vmatprep.subr.mxu0 0.0
    %257 = vmatpush2.msra.mxu0 %v195
    %258 = vmatprep.subr.mxu0 0.0
    %259 = vmatpush2.msra.mxu0 %v194
    %260 = vmatprep.subr.mxu0 0.0
    %261 = vmatpush2.msra.mxu0 %v193
    %262 = vmatprep.subr.mxu0 0.0
    %263 = vmatpush2.msra.mxu0 %v192
    %264 = vmatprep.subr.mxu0 0.0
    %265 = vmatpush2.msra.mxu0 %v191
    %266 = vmatprep.subr.mxu0 0.0
    %267 = vmatpush2.msra.mxu0 %v190
    %268 = vmatprep.subr.mxu0 0.0
    %269 = vmatpush2.msra.mxu0 %v189
    %270 = vmatprep.subr.mxu0 0.0
    %271 = vmatpush2.msra.mxu0 %v188
    %272 = vmatprep.subr.mxu0 0.0
    %273 = vmatpush2.msra.mxu0 %v187
    %274 = vmatprep.mubr.f32.mxu0 %v168
    %275 = vmatmul.mubr.f32.gmra.mxu0 %v167
    %v276 = vpop.f32.mrf.mxu0
    %v277 = vadd.f32 %v208, %v276
    %v278 = vpop.f32.mrf.mxu0
    %279 = vmatprep.mubr.f32.mxu0 %v170
    %280 = vmatmul.mubr.f32.gmra.mxu0 %v169
    %v281 = vpop.f32.mrf.mxu0
    %v282 = vadd.f32 %v208, %v281
    %v283 = vpop.f32.mrf.mxu0
    %284 = vdwg.mxu0
    %285 = vst.msk [vmem:[#allocation2] sm:$0xff] %vm51, %v277
    %286 = vst.msk [vmem:[#allocation2 + $0x8] sm:$0xff] %vm51, %v282
    // Predicated region
    $region22: #{tpu_custom_call.1} parent=1 // pred_check
      _
    $region23: #{tpu_custom_call.1} parent=1 // pred_check_branch
      %288 = sbr.rel (0) target = $region25
    $region24: #{tpu_custom_call.1} parent=1 // pred_region
      %s290 = ssub.s32 256, 256
      %291 = vsyncadd [#allocation3], %s290
      %s292 = sshll.u32 [#allocation2], 4
      %s293 = int_to_ptr.vmem [resolvable:$true] %s292
      %298 = dma.vmem_to_hbm [thread:$0]  %s293, 256, %s5, [#allocation3], 128, 128, 8
    $region25: #{tpu_custom_call.1} parent=1 // pred_fallthru
      _
    // Predicated region
    $region26: #{tpu_custom_call.1} parent=1 // pred_check
      _
    $region27: #{tpu_custom_call.1} parent=1 // pred_check_branch
      %300 = sbr.rel (0) target = $region29
    $region28: #{tpu_custom_call.1} parent=1 // pred_region
      %301 = dma.done [#allocation3], 256
    $region29: #{tpu_custom_call.1} parent=1 // pred_fallthru
      _
    %302 = vsyncpa [#allocation3], 1

</llo_original>
